<compile_context>
chip_gen: v6e
topology: v6e:2x2x1
jax: 0.10.0
libtpu: 0.0.40
codegen_flags: <defaults>
</compile_context>

<pallas_src>
import functools
import math

import jax
import jax.numpy as jnp
from jax.experimental import pallas as pl
from jax.experimental.pallas import tpu as pltpu


def _round_up(x, m):
    return ((x + m - 1) // m) * m


_VMEM_LIMIT_BYTES = 48 * 1024 * 1024   # < v7x 64 MiB physical, > v5e 16 MiB scoped default
_BN_EPS = 1e-5


# ----------------------------- Pallas kernels -------------------------------

def gcn_node_kernel(h_ref, adj_ref,
                    w_emb_ref, b_emb_ref,
                    w_gcn_ref, b_gcn_ref,
                    bnw_scale_ref, bnw_shift_ref, mask_ref,
                    hg_ref, nw_ref,
                    h1_scr, agg_scr):
    """Channels-first node pipeline for Bt graphs per grid step.

    embedding_h -> (in_feat_dropout = identity in eval) -> GraphConv(norm='both')
    aggregation -> linear with folded BatchNorm1d(hidden) -> leaky_relu ==> hg,
    plus gnn_node_weight = channel mean + folded BatchNorm1d(window).
    The window stays on the lane axis throughout (lane-dense stores)."""
    bt, wp, _ = adj_ref.shape

    # (1) embedding on the whole (Din, Bt*Wp) slab: one wide MXU pass instead of
    #     Bt tiny K=Din matmuls.
    h1 = jnp.dot(w_emb_ref[...], h_ref[...],
                 preferred_element_type=jnp.float32) + b_emb_ref[...]
    h1_scr[...] = h1.astype(jnp.bfloat16)

    # (2) per-graph GraphConv aggregation (dominant HBM stream, bf16 MXU feed).
    #     Fully-unrolled static loop with 128-aligned static lane slices; each
    #     iteration writes straight to scratch so live ranges stay bounded.
    # TODO(synk): replace the dense (Wp, Wp) adjacency matmul with a CSR /
    # scalar-prefetched neighbour-list aggregation (real node degree is ~3-4).
    for i in range(bt):
        sl = slice(i * wp, (i + 1) * wp)
        agg_scr[:, sl] = jnp.dot(h1_scr[:, sl], adj_ref[i],
                                 preferred_element_type=jnp.float32)

    # (3) linear (+ BatchNorm1d(hidden) folded host-side) + leaky_relu(0.01) on
    #     the full (H, Bt*Wp) slab; padded window columns are zeroed.
    h2 = jnp.dot(w_gcn_ref[...], agg_scr[...],
                 preferred_element_type=jnp.float32) + b_gcn_ref[...]
    h2 = jnp.where(h2 > 0, h2, 0.01 * h2) * mask_ref[...]

    # (4) node weight = channel mean + folded BatchNorm1d(window), on the slab.
    nw = (jnp.mean(h2, axis=0, keepdims=True) * bnw_scale_ref[...]
          + bnw_shift_ref[...])

    # (5) per-graph lane-dense stores; outputs stay channels-first (Bt, H, Wp)
    #     so the NCHW flatten before the MLP is a plain reshape.
    h2 = h2.astype(hg_ref.dtype)
    for i in range(bt):
        sl = slice(i * wp, (i + 1) * wp)
        hg_ref[i] = h2[:, sl]
        nw_ref[i] = nw[:, sl]


def linear_kernel(x_ref, w_ref, b_ref, o_ref, acc_ref, *, relu):
    """One (N-tile, K-tile) step of y = [relu](x @ w + b); f32 accumulator."""
    k = pl.program_id(1)

    @pl.when(k == 0)
    def _init():
        acc_ref[...] = jnp.zeros_like(acc_ref)

    acc_ref[...] += jnp.dot(x_ref[...], w_ref[...],
                            preferred_element_type=jnp.float32)

    @pl.when(k == pl.num_programs(1) - 1)
    def _finish():
        y = acc_ref[...] + b_ref[...]
        if relu:
            y = jnp.maximum(y, 0.0)
        o_ref[...] = y.astype(o_ref.dtype)


# ------------------------------- wrappers ------------------------------------

def run_gcn_nodes(h, adj_norm, params, wp):
    """h: (B, W, Din); adj_norm: (B, W, W) = D_out^-1/2 A D_in^-1/2.
       Returns hg (B, H, wp) bf16 (padded columns zeroed) and node_weight (B, W)."""
    B, W, Din = h.shape
    H = params["w_emb"].shape[1]
    pad_w = wp - W

    # channels-first slab: h_slab[d, b*wp + w] = h[b, w, d]
    h_slab = jnp.transpose(h, (2, 0, 1))                        # (Din, B, W)
    if pad_w:
        h_slab = jnp.pad(h_slab, ((0, 0), (0, 0), (0, pad_w)))
    h_slab = h_slab.reshape(Din, B * wp)

    # agg^T = h1^T @ adj^T ; adjacency is the dominant HBM stream -> bf16
    adj_t = jnp.transpose(adj_norm, (0, 2, 1))
    if pad_w:
        adj_t = jnp.pad(adj_t, ((0, 0), (0, pad_w), (0, pad_w)))
    adj_t = adj_t.astype(jnp.bfloat16)

    # ---- fold eval-mode BatchNorms into the preceding linears (host-side) ----
    w_emb_t = params["w_emb"].T.astype(jnp.float32)             # (H, Din)
    b_emb = params["b_emb"].reshape(-1, 1).astype(jnp.float32)  # (H, 1)

    bn_scale = jax.lax.rsqrt(params["bn_v"] + _BN_EPS) * params["bn_g"]      # (H,)
    w_gcn_eff = (params["w_gcn"].T * bn_scale[:, None]).astype(jnp.float32)  # (H, H)
    b_gcn_eff = ((params["b_gcn"].reshape(-1) - params["bn_m"]) * bn_scale
                 + params["bn_b"]).reshape(-1, 1).astype(jnp.float32)        # (H, 1)

    bnw_scale = jax.lax.rsqrt(params["bnw_v"] + _BN_EPS) * params["bnw_g"]   # (W,)
    bnw_shift = params["bnw_b"] - params["bnw_m"] * bnw_scale                # (W,)

    Bt = next(t for t in (8, 4, 2, 1) if B % t == 0)            # graphs per grid step

    def slab_row(a):                                            # (W,) -> (1, Bt*wp)
        a = a.reshape(1, -1).astype(jnp.float32)
        if pad_w:
            a = jnp.pad(a, ((0, 0), (0, pad_w)))
        return jnp.tile(a, (1, Bt))
    bnw_scale_t = slab_row(bnw_scale)
    bnw_shift_t = slab_row(bnw_shift)
    mask_t = slab_row((jnp.arange(wp) < W).astype(jnp.float32)[:W])  # zeros in padding

    p_spec = lambda a: pl.BlockSpec(a.shape, lambda b: (0, 0))
    in_specs = [
        pl.BlockSpec((Din, Bt * wp), lambda b: (0, b)),
        pl.BlockSpec((Bt, wp, wp), lambda b: (b, 0, 0)),
        p_spec(w_emb_t), p_spec(b_emb),
        p_spec(w_gcn_eff), p_spec(b_gcn_eff),
        p_spec(bnw_scale_t), p_spec(bnw_shift_t), p_spec(mask_t),
    ]
    out_specs = (
        pl.BlockSpec((Bt, H, wp), lambda b: (b, 0, 0)),
        pl.BlockSpec((Bt, 1, wp), lambda b: (b, 0, 0)),
    )
    out_shape = (
        jax.ShapeDtypeStruct((B, H, wp), jnp.bfloat16),
        jax.ShapeDtypeStruct((B, 1, wp), jnp.float32),
    )
    hg, nw = pl.pallas_call(
        gcn_node_kernel,
        grid=(B // Bt,),
        in_specs=in_specs,
        out_specs=out_specs,
        out_shape=out_shape,
        scratch_shapes=[pltpu.VMEM((H, Bt * wp), jnp.bfloat16),
                        pltpu.VMEM((H, Bt * wp), jnp.float32)],
        compiler_params=pltpu.CompilerParams(
            dimension_semantics=("parallel",),
            vmem_limit_bytes=_VMEM_LIMIT_BYTES),
    )(h_slab, adj_t, w_emb_t, b_emb, w_gcn_eff, b_gcn_eff,
      bnw_scale_t, bnw_shift_t, mask_t)
    return hg, nw[:, 0, :W]


def tiled_linear(x, w, b, *, relu, out_dtype=jnp.float32, tk_max=2048, tn_max=2048):
    """y = [relu](x @ w + b), tiled over (N, K) with bf16 weight/activation
       streaming and an f32 VMEM accumulator.  Reduction (K) axis is last; the
       N axis is 'parallel' so a megacore splits the weight stream."""
    Bm, K = x.shape
    N = w.shape[1]
    x = x.astype(jnp.bfloat16)
    w = w.astype(jnp.bfloat16)
    # TODO(synk): per-target weight quantization (fp8 on v7x, int8 on v5e/v6e)
    # with per-channel scales would further halve the dominant weight stream.
    b = b.reshape(1, -1).astype(jnp.float32)

    if K <= tk_max:
        tk, Kp = K, K
    else:
        tk = tk_max
        Kp = _round_up(K, tk)
    if N <= tn_max:
        tn = _round_up(N, 128)       # always lane-dense output stores
        Np = tn
    else:
        tn = tn_max
        Np = _round_up(N, tn)

    if Kp != K:
        x = jnp.pad(x, ((0, 0), (0, Kp - K)))
        w = jnp.pad(w, ((0, Kp - K), (0, 0)))
    if Np != N:
        w = jnp.pad(w, ((0, 0), (0, Np - N)))
        b = jnp.pad(b, ((0, 0), (0, Np - N)))

    grid = (Np // tn, Kp // tk)
    out_itemsize = 2 if out_dtype == jnp.bfloat16 else 4
    cost = pl.CostEstimate(
        flops=2 * Bm * Kp * Np,
        transcendentals=0,
        bytes_accessed=(x.size * 2 * (Np // tn) + w.size * 2 + b.size * 4
                        + Bm * Np * out_itemsize),
    )
    out = pl.pallas_call(
        functools.partial(linear_kernel, relu=relu),
        grid=grid,
        in_specs=[
            pl.BlockSpec((Bm, tk), lambda n, k: (0, k)),
            pl.BlockSpec((tk, tn), lambda n, k: (k, n)),
            pl.BlockSpec((1, tn), lambda n, k: (0, n)),
        ],
        out_specs=pl.BlockSpec((Bm, tn), lambda n, k: (0, n)),
        out_shape=jax.ShapeDtypeStruct((Bm, Np), out_dtype),
        scratch_shapes=[pltpu.VMEM((Bm, tn), jnp.float32)],
        compiler_params=pltpu.CompilerParams(
            dimension_semantics=("parallel", "arbitrary"),
            vmem_limit_bytes=_VMEM_LIMIT_BYTES),
        cost_estimate=cost,
    )(x, w, b)
    return out[:, :N] if Np != N else out


def mlp_readout(x, w1, b1, w2, b2, w3, b3):
    """MLPReadout (L=2): Linear -> ReLU -> Linear -> ReLU -> Linear."""
    y = tiled_linear(x, w1, b1, relu=True, out_dtype=jnp.bfloat16)
    y = tiled_linear(y, w2, b2, relu=True, out_dtype=jnp.bfloat16)
    return tiled_linear(y, w3, b3, relu=False, out_dtype=jnp.float32)


def gcnnet_forward(h, adj_norm, params):
    """Eval-mode GCNNet forward: returns (pred, node_weight)."""
    B, W, _ = h.shape
    H = params["w_emb"].shape[1]
    Wp = _round_up(W, 128)                                      # lane-dense window
    # TODO(synk): residual connection in GCNLayer not modeled (assumed False).
    hg, node_weight = run_gcn_nodes(h, adj_norm, params, Wp)    # (B, H, Wp) bf16, (B, W)

    # torch.flatten of the NCHW ConvReadout output is channel-major, i.e. a plain
    # reshape of the channels-first layout.  We keep the padded Wp layout (no
    # slice/pad round trip): padded hg columns are zeroed in-kernel and the
    # matching rows of w1 are zero-padded here (one-time re-layout).
    h_final = hg.reshape(B, H * Wp)
    F1 = params["w1"].shape[1]
    w1p = jnp.pad(params["w1"].reshape(H, W, F1),
                  ((0, 0), (0, Wp - W), (0, 0))).reshape(H * Wp, F1)

    pred = mlp_readout(h_final, w1p, params["b1"],
                       params["w2"], params["b2"],
                       params["w3"], params["b3"])
    return pred, node_weight


def linear_init(key, fan_in, fan_out):
    k1, k2 = jax.random.split(key)
    bound = 1.0 / math.sqrt(fan_in)
    w = jax.random.uniform(k1, (fan_in, fan_out), jnp.float32, -bound, bound)
    b = jax.random.uniform(k2, (1, fan_out), jnp.float32, -bound, bound)
    return w, b


if __name__ == "__main__":
    # Small shapes consistent with the module: the real net uses window_size=501
    # nodes per RNA graph and hidden_dim=32 (=> MLP input 501*32=16032).  We
    # scale the window down (W=32) while keeping every structural relation
    # (MLP input = W*hidden, halving MLP dims, BatchNorm1d over the window,
    # n_layers=1, n_classes=2).
    B, W, DIN, H, NCLS = 2, 32, 8, 32, 2

    key = jax.random.PRNGKey(0)
    k_h, k_emb, k_gcn, k_f1, k_f2, k_f3 = jax.random.split(key, 6)

    # node features of the batched graph: (B*W, DIN) -> (B, W, DIN)
    h_nodes = jax.random.normal(k_h, (B * W, DIN), jnp.float32)
    h = h_nodes.reshape(B, W, DIN)

    # synthetic RNA-window graph: backbone chain + a few deterministic "base-pair" edges
    A = jnp.zeros((W, W), jnp.float32)
    idx = jnp.arange(W - 1)
    A = A.at[idx, idx + 1].set(1.0).at[idx + 1, idx].set(1.0)
    pairs = jnp.arange(W // 4)
    A = A.at[pairs, W - 1 - pairs].set(1.0).at[W - 1 - pairs, pairs].set(1.0)
    A = jnp.broadcast_to(A, (B, W, W))
    # DGL GraphConv norm='both': D_out^-1/2 A D_in^-1/2 with degrees clamped >= 1
    deg_out = jnp.maximum(A.sum(axis=-1), 1.0)
    deg_in = jnp.maximum(A.sum(axis=-2), 1.0)
    adj_norm = A * (deg_out ** -0.5)[..., :, None] * (deg_in ** -0.5)[..., None, :]

    # deterministic parameters (PyTorch-default-style uniform init; fresh BN stats)
    w_emb, b_emb = linear_init(k_emb, DIN, H)
    w_gcn, b_gcn = linear_init(k_gcn, H, H)
    F0 = W * H                 # 16032 in the real module
    F1, F2 = F0 // 2, F0 // 4  # MLPReadout halving
    w1, b1 = linear_init(k_f1, F0, F1)
    w2, b2 = linear_init(k_f2, F1, F2)
    w3, b3 = linear_init(k_f3, F2, NCLS)

    params = dict(
        w_emb=w_emb, b_emb=b_emb, w_gcn=w_gcn, b_gcn=b_gcn,
        bn_g=jnp.ones((H,), jnp.float32), bn_b=jnp.zeros((H,), jnp.float32),
        bn_m=jnp.zeros((H,), jnp.float32), bn_v=jnp.ones((H,), jnp.float32),
        bnw_g=jnp.ones((W,), jnp.float32), bnw_b=jnp.zeros((W,), jnp.float32),
        bnw_m=jnp.zeros((W,), jnp.float32), bnw_v=jnp.ones((W,), jnp.float32),
        w1=w1, b1=b1, w2=w2, b2=b2, w3=w3, b3=b3,
    )

    pred, node_weight = gcnnet_forward(h, adj_norm, params)     # (B, NCLS), (B, W)
    jax.block_until_ready((pred, node_weight))
    assert pred.shape == (B, NCLS) and node_weight.shape == (B, W)
    assert bool(jnp.all(jnp.isfinite(pred))) and bool(jnp.all(jnp.isfinite(node_weight)))
    print("KERNEL_OK")
</pallas_src>

<mosaic_0001>
module attributes {stable_mosaic.version = 11 : i64} {
  func.func @gcn_node_kernel(%arg0: i32, %arg1: memref<8x256xf32, #tpu.memory_space<vmem>>, %arg2: memref<2x128x128xbf16, #tpu.memory_space<vmem>>, %arg3: memref<32x8xf32, #tpu.memory_space<vmem>>, %arg4: memref<32x1xf32, #tpu.memory_space<vmem>>, %arg5: memref<32x32xf32, #tpu.memory_space<vmem>>, %arg6: memref<32x1xf32, #tpu.memory_space<vmem>>, %arg7: memref<1x256xf32, #tpu.memory_space<vmem>>, %arg8: memref<1x256xf32, #tpu.memory_space<vmem>>, %arg9: memref<1x256xf32, #tpu.memory_space<vmem>>, %arg10: memref<2x32x128xbf16, #tpu.memory_space<vmem>>, %arg11: memref<2x1x128xf32, #tpu.memory_space<vmem>>, %arg12: memref<32x256xbf16, #tpu.memory_space<vmem>>, %arg13: memref<32x256xf32, #tpu.memory_space<vmem>>) attributes {dimension_semantics = [#tpu.dimension_semantics<parallel>], iteration_bounds = array<i64: 1>, scalar_prefetch = 0 : i64, scratch_operands = 2 : i64, tpu.core_type = #tpu.core_type<tc>, window_params = [{transform_indices = @transform_0, window_bounds = array<i64: 8, 256>}, {transform_indices = @transform_1, window_bounds = array<i64: 2, 128, 128>}, {pipeline_mode = #tpu.pipeline_mode<synchronous>, transform_indices = @transform_2, window_bounds = array<i64: 32, 8>}, {pipeline_mode = #tpu.pipeline_mode<synchronous>, transform_indices = @transform_3, window_bounds = array<i64: 32, 1>}, {pipeline_mode = #tpu.pipeline_mode<synchronous>, transform_indices = @transform_4, window_bounds = array<i64: 32, 32>}, {pipeline_mode = #tpu.pipeline_mode<synchronous>, transform_indices = @transform_5, window_bounds = array<i64: 32, 1>}, {pipeline_mode = #tpu.pipeline_mode<synchronous>, transform_indices = @transform_6, window_bounds = array<i64: 1, 256>}, {pipeline_mode = #tpu.pipeline_mode<synchronous>, transform_indices = @transform_7, window_bounds = array<i64: 1, 256>}, {pipeline_mode = #tpu.pipeline_mode<synchronous>, transform_indices = @transform_8, window_bounds = array<i64: 1, 256>}, {transform_indices = @transform_9, window_bounds = array<i64: 2, 32, 128>}, {transform_indices = @transform_10, window_bounds = array<i64: 2, 1, 128>}]} {
    %c0 = arith.constant 0 : index
    %c0_0 = arith.constant 0 : index
    %0 = vector.load %arg3[%c0, %c0_0] : memref<32x8xf32, #tpu.memory_space<vmem>>, vector<32x8xf32>
    %c0_1 = arith.constant 0 : index
    %c0_2 = arith.constant 0 : index
    %1 = vector.load %arg1[%c0_1, %c0_2] : memref<8x256xf32, #tpu.memory_space<vmem>>, vector<8x256xf32>
    %cst = arith.constant dense<0.000000e+00> : vector<32x256xf32>
    %2 = tpu.matmul %0, %1, %cst {dimension_numbers = #tpu.dot_dimension_numbers<[1], [0], [0], [1], [0, 0, 1, 1], [], []>} : vector<32x8xf32>, vector<8x256xf32>, vector<32x256xf32> -> vector<32x256xf32>
    %c0_3 = arith.constant 0 : index
    %c0_4 = arith.constant 0 : index
    %3 = vector.load %arg4[%c0_3, %c0_4] : memref<32x1xf32, #tpu.memory_space<vmem>>, vector<32x1xf32>
    %4 = vector.broadcast %3 : vector<32x1xf32> to vector<32x256xf32>
    %5 = arith.addf %2, %4 : vector<32x256xf32>
    %6 = arith.truncf %5 : vector<32x256xf32> to vector<32x256xbf16>
    %c0_5 = arith.constant 0 : index
    %c0_6 = arith.constant 0 : index
    %7 = vector.load %arg12[%c0_5, %c0_6] : memref<32x256xbf16, #tpu.memory_space<vmem>>, vector<32x256xbf16>
    tpu.vector_store %arg12[%c0_5, %c0_6], %6 {strides = array<i32>} : memref<32x256xbf16, #tpu.memory_space<vmem>>, vector<32x256xbf16>,
    %c0_7 = arith.constant 0 : index
    %c0_8 = arith.constant 0 : index
    %8 = vector.load %arg12[%c0_7, %c0_8] : memref<32x256xbf16, #tpu.memory_space<vmem>>, vector<32x128xbf16>
    %c0_9 = arith.constant 0 : index
    %c0_10 = arith.constant 0 : index
    %c0_11 = arith.constant 0 : index
    %9 = vector.load %arg2[%c0_9, %c0_10, %c0_11] : memref<2x128x128xbf16, #tpu.memory_space<vmem>>, vector<1x128x128xbf16>
    %10 = vector.shape_cast %9 : vector<1x128x128xbf16> to vector<128x128xbf16>
    %cst_12 = arith.constant dense<0.000000e+00> : vector<32x128xf32>
    %11 = tpu.matmul %8, %10, %cst_12 {dimension_numbers = #tpu.dot_dimension_numbers<[1], [0], [0], [1], [0, 0, 1, 1], [], []>} : vector<32x128xbf16>, vector<128x128xbf16>, vector<32x128xf32> -> vector<32x128xf32>
    %c0_13 = arith.constant 0 : index
    %c0_14 = arith.constant 0 : index
    %12 = vector.load %arg13[%c0_13, %c0_14] : memref<32x256xf32, #tpu.memory_space<vmem>>, vector<32x128xf32>
    tpu.vector_store %arg13[%c0_13, %c0_14], %11 {strides = array<i32>} : memref<32x256xf32, #tpu.memory_space<vmem>>, vector<32x128xf32>,
    %c0_15 = arith.constant 0 : index
    %c128 = arith.constant 128 : index
    %13 = vector.load %arg12[%c0_15, %c128] : memref<32x256xbf16, #tpu.memory_space<vmem>>, vector<32x128xbf16>
    %c1 = arith.constant 1 : index
    %c0_16 = arith.constant 0 : index
    %c0_17 = arith.constant 0 : index
    %14 = vector.load %arg2[%c1, %c0_16, %c0_17] : memref<2x128x128xbf16, #tpu.memory_space<vmem>>, vector<1x128x128xbf16>
    %15 = vector.shape_cast %14 : vector<1x128x128xbf16> to vector<128x128xbf16>
    %cst_18 = arith.constant dense<0.000000e+00> : vector<32x128xf32>
    %16 = tpu.matmul %13, %15, %cst_18 {dimension_numbers = #tpu.dot_dimension_numbers<[1], [0], [0], [1], [0, 0, 1, 1], [], []>} : vector<32x128xbf16>, vector<128x128xbf16>, vector<32x128xf32> -> vector<32x128xf32>
    %c0_19 = arith.constant 0 : index
    %c128_20 = arith.constant 128 : index
    %17 = vector.load %arg13[%c0_19, %c128_20] : memref<32x256xf32, #tpu.memory_space<vmem>>, vector<32x128xf32>
    tpu.vector_store %arg13[%c0_19, %c128_20], %16 {strides = array<i32>} : memref<32x256xf32, #tpu.memory_space<vmem>>, vector<32x128xf32>,
    %c0_21 = arith.constant 0 : index
    %c0_22 = arith.constant 0 : index
    %18 = vector.load %arg5[%c0_21, %c0_22] : memref<32x32xf32, #tpu.memory_space<vmem>>, vector<32x32xf32>
    %c0_23 = arith.constant 0 : index
    %c0_24 = arith.constant 0 : index
    %19 = vector.load %arg13[%c0_23, %c0_24] : memref<32x256xf32, #tpu.memory_space<vmem>>, vector<32x256xf32>
    %cst_25 = arith.constant dense<0.000000e+00> : vector<32x256xf32>
    %20 = tpu.matmul %18, %19, %cst_25 {dimension_numbers = #tpu.dot_dimension_numbers<[1], [0], [0], [1], [0, 0, 1, 1], [], []>} : vector<32x32xf32>, vector<32x256xf32>, vector<32x256xf32> -> vector<32x256xf32>
    %c0_26 = arith.constant 0 : index
    %c0_27 = arith.constant 0 : index
    %21 = vector.load %arg6[%c0_26, %c0_27] : memref<32x1xf32, #tpu.memory_space<vmem>>, vector<32x1xf32>
    %22 = vector.broadcast %21 : vector<32x1xf32> to vector<32x256xf32>
    %23 = arith.addf %20, %22 : vector<32x256xf32>
    %cst_28 = arith.constant 0.000000e+00 : f32
    %24 = vector.broadcast %cst_28 : f32 to vector<32x256xf32>
    %25 = arith.cmpf ogt, %23, %24 : vector<32x256xf32>
    %cst_29 = arith.constant 0.00999999977 : f32
    %26 = vector.broadcast %cst_29 : f32 to vector<32x256xf32>
    %27 = arith.mulf %26, %23 : vector<32x256xf32>
    %28 = arith.select %25, %23, %27 : vector<32x256xi1>, vector<32x256xf32>
    %c0_30 = arith.constant 0 : index
    %c0_31 = arith.constant 0 : index
    %29 = vector.load %arg9[%c0_30, %c0_31] : memref<1x256xf32, #tpu.memory_space<vmem>>, vector<1x256xf32>
    %30 = vector.broadcast %29 : vector<1x256xf32> to vector<32x256xf32>
    %31 = arith.mulf %28, %30 : vector<32x256xf32>
    %cst_32 = arith.constant dense<0.000000e+00> : vector<256xf32>
    %32 = vector.multi_reduction <add>, %31, %cst_32 [0] : vector<32x256xf32> to vector<256xf32>
    %33 = vector.shape_cast %32 : vector<256xf32> to vector<1x256xf32>
    %cst_33 = arith.constant 3.200000e+01 : f32
    %34 = vector.broadcast %cst_33 : f32 to vector<1x256xf32>
    %35 = arith.divf %33, %34 : vector<1x256xf32>
    %c0_34 = arith.constant 0 : index
    %c0_35 = arith.constant 0 : index
    %36 = vector.load %arg7[%c0_34, %c0_35] : memref<1x256xf32, #tpu.memory_space<vmem>>, vector<1x256xf32>
    %37 = arith.mulf %35, %36 : vector<1x256xf32>
    %c0_36 = arith.constant 0 : index
    %c0_37 = arith.constant 0 : index
    %38 = vector.load %arg8[%c0_36, %c0_37] : memref<1x256xf32, #tpu.memory_space<vmem>>, vector<1x256xf32>
    %39 = arith.addf %37, %38 : vector<1x256xf32>
    %40 = arith.truncf %31 : vector<32x256xf32> to vector<32x256xbf16>
    %41 = vector.extract_strided_slice %40 {offsets = [0, 0], sizes = [32, 128], strides = [1, 1]} : vector<32x256xbf16> to vector<32x128xbf16>
    %c0_38 = arith.constant 0 : index
    %c0_39 = arith.constant 0 : index
    %c0_40 = arith.constant 0 : index
    %42 = vector.load %arg10[%c0_38, %c0_39, %c0_40] : memref<2x32x128xbf16, #tpu.memory_space<vmem>>, vector<1x32x128xbf16>
    %43 = vector.shape_cast %42 : vector<1x32x128xbf16> to vector<32x128xbf16>
    %44 = vector.shape_cast %41 : vector<32x128xbf16> to vector<1x32x128xbf16>
    tpu.vector_store %arg10[%c0_38, %c0_39, %c0_40], %44 {strides = array<i32>} : memref<2x32x128xbf16, #tpu.memory_space<vmem>>, vector<1x32x128xbf16>,
    %45 = vector.extract_strided_slice %39 {offsets = [0, 0], sizes = [1, 128], strides = [1, 1]} : vector<1x256xf32> to vector<1x128xf32>
    %c0_41 = arith.constant 0 : index
    %c0_42 = arith.constant 0 : index
    %c0_43 = arith.constant 0 : index
    %46 = vector.load %arg11[%c0_41, %c0_42, %c0_43] : memref<2x1x128xf32, #tpu.memory_space<vmem>>, vector<1x1x128xf32>
    %47 = vector.shape_cast %46 : vector<1x1x128xf32> to vector<1x128xf32>
    %48 = vector.shape_cast %45 : vector<1x128xf32> to vector<1x1x128xf32>
    tpu.vector_store %arg11[%c0_41, %c0_42, %c0_43], %48 {strides = array<i32>} : memref<2x1x128xf32, #tpu.memory_space<vmem>>, vector<1x1x128xf32>,
    %49 = vector.extract_strided_slice %40 {offsets = [0, 128], sizes = [32, 128], strides = [1, 1]} : vector<32x256xbf16> to vector<32x128xbf16>
    %c1_44 = arith.constant 1 : index
    %c0_45 = arith.constant 0 : index
    %c0_46 = arith.constant 0 : index
    %50 = vector.load %arg10[%c1_44, %c0_45, %c0_46] : memref<2x32x128xbf16, #tpu.memory_space<vmem>>, vector<1x32x128xbf16>
    %51 = vector.shape_cast %50 : vector<1x32x128xbf16> to vector<32x128xbf16>
    %52 = vector.shape_cast %49 : vector<32x128xbf16> to vector<1x32x128xbf16>
    tpu.vector_store %arg10[%c1_44, %c0_45, %c0_46], %52 {strides = array<i32>} : memref<2x32x128xbf16, #tpu.memory_space<vmem>>, vector<1x32x128xbf16>,
    %53 = vector.extract_strided_slice %39 {offsets = [0, 128], sizes = [1, 128], strides = [1, 1]} : vector<1x256xf32> to vector<1x128xf32>
    %c1_47 = arith.constant 1 : index
    %c0_48 = arith.constant 0 : index
    %c0_49 = arith.constant 0 : index
    %54 = vector.load %arg11[%c1_47, %c0_48, %c0_49] : memref<2x1x128xf32, #tpu.memory_space<vmem>>, vector<1x1x128xf32>
    %55 = vector.shape_cast %54 : vector<1x1x128xf32> to vector<1x128xf32>
    %56 = vector.shape_cast %53 : vector<1x128xf32> to vector<1x1x128xf32>
    tpu.vector_store %arg11[%c1_47, %c0_48, %c0_49], %56 {strides = array<i32>} : memref<2x1x128xf32, #tpu.memory_space<vmem>>, vector<1x1x128xf32>,
    return
  }
  func.func @transform_0(%arg0: i32) -> (i32, i32) {
    %c0_i32 = arith.constant 0 : i32
    %c0_i32_0 = arith.constant 0 : i32
    return %c0_i32, %arg0 : i32, i32
  }
  func.func @transform_1(%arg0: i32) -> (i32, i32, i32) {
    %c0_i32 = arith.constant 0 : i32
    %c0_i32_0 = arith.constant 0 : i32
    %c0_i32_1 = arith.constant 0 : i32
    return %arg0, %c0_i32, %c0_i32_0 : i32, i32, i32
  }
  func.func @transform_2(%arg0: i32) -> (i32, i32) {
    %c0_i32 = arith.constant 0 : i32
    %c0_i32_0 = arith.constant 0 : i32
    %c0_i32_1 = arith.constant 0 : i32
    return %c0_i32, %c0_i32_0 : i32, i32
  }
  func.func @transform_3(%arg0: i32) -> (i32, i32) {
    %c0_i32 = arith.constant 0 : i32
    %c0_i32_0 = arith.constant 0 : i32
    %c0_i32_1 = arith.constant 0 : i32
    return %c0_i32, %c0_i32_0 : i32, i32
  }
  func.func @transform_4(%arg0: i32) -> (i32, i32) {
    %c0_i32 = arith.constant 0 : i32
    %c0_i32_0 = arith.constant 0 : i32
    %c0_i32_1 = arith.constant 0 : i32
    return %c0_i32, %c0_i32_0 : i32, i32
  }
  func.func @transform_5(%arg0: i32) -> (i32, i32) {
    %c0_i32 = arith.constant 0 : i32
    %c0_i32_0 = arith.constant 0 : i32
    %c0_i32_1 = arith.constant 0 : i32
    return %c0_i32, %c0_i32_0 : i32, i32
  }
  func.func @transform_6(%arg0: i32) -> (i32, i32) {
    %c0_i32 = arith.constant 0 : i32
    %c0_i32_0 = arith.constant 0 : i32
    %c0_i32_1 = arith.constant 0 : i32
    return %c0_i32, %c0_i32_0 : i32, i32
  }
  func.func @transform_7(%arg0: i32) -> (i32, i32) {
    %c0_i32 = arith.constant 0 : i32
    %c0_i32_0 = arith.constant 0 : i32
    %c0_i32_1 = arith.constant 0 : i32
    return %c0_i32, %c0_i32_0 : i32, i32
  }
  func.func @transform_8(%arg0: i32) -> (i32, i32) {
    %c0_i32 = arith.constant 0 : i32
    %c0_i32_0 = arith.constant 0 : i32
    %c0_i32_1 = arith.constant 0 : i32
    return %c0_i32, %c0_i32_0 : i32, i32
  }
  func.func @transform_9(%arg0: i32) -> (i32, i32, i32) {
    %c0_i32 = arith.constant 0 : i32
    %c0_i32_0 = arith.constant 0 : i32
    %c0_i32_1 = arith.constant 0 : i32
    return %arg0, %c0_i32, %c0_i32_0 : i32, i32, i32
  }
  func.func @transform_10(%arg0: i32) -> (i32, i32, i32) {
    %c0_i32 = arith.constant 0 : i32
    %c0_i32_0 = arith.constant 0 : i32
    %c0_i32_1 = arith.constant 0 : i32
    return %arg0, %c0_i32, %c0_i32_0 : i32, i32, i32
  }
}

</mosaic_0001>

<llo_original>
// kernel: tpu_custom_call.1
$region0: #{tpu_custom_call.1}
  #allocation0 [shape = 'u32[]', space=smem, size = 0x4, offset = 0x4, fixed_abs, tag = 'smem constant byte address 0x4 - core index']
  #allocation1 [shape = 'u32[144,128]{1,0:T(1,128)}', space=vmem, size = 0x12000, scoped, tag = 'internal scratch']
  #allocation2 [shape = 'bf16[32,256]{1,0:T(8,128)(2,1)}', space=vmem, size = 0x4000, scoped, tag = 'scratch operand']
  #allocation3 [shape = 'f32[32,256]{1,0:T(8,128)}', space=vmem, size = 0x8000, scoped, tag = 'scratch operand']
  %s0 = inlined_call_operand.vmem [shape: f32[8,256], index: 0, kind: input, shape index: {}]
  %s1 = inlined_call_operand.hbm [shape: bf16[2,128,128], index: 1, kind: input, shape index: {}]
  %s2 = inlined_call_operand.vmem [shape: f32[32,8], index: 2, kind: input, shape index: {}]
  %s3 = inlined_call_operand.vmem [shape: f32[32,1], index: 3, kind: input, shape index: {}]
  %s4 = inlined_call_operand.vmem [shape: f32[32,32], index: 4, kind: input, shape index: {}]
  %s5 = inlined_call_operand.vmem [shape: f32[32,1], index: 5, kind: input, shape index: {}]
  %s6 = inlined_call_operand.vmem [shape: f32[1,256], index: 6, kind: input, shape index: {}]
  %s7 = inlined_call_operand.vmem [shape: f32[1,256], index: 7, kind: input, shape index: {}]
  %s8 = inlined_call_operand.vmem [shape: f32[1,256], index: 8, kind: input, shape index: {}]
  %s9 = inlined_call_operand.hbm [shape: bf16[2,32,128], index: 9, kind: output, shape index: {0}]
  %s10 = inlined_call_operand.hbm [shape: f32[2,1,128], index: 10, kind: output, shape index: {1}]
  %11 = xla_tuple %s9, %s10
  %s12 = sld [smem:[#allocation0]]
  $region58: #{tpu_custom_call.1} parent=0
    _
  %s14 = ssub.s32 1, %s12
  %s15 = scalar_select 0, %s14, %s12
  $region1: #{tpu_custom_call.1} parent=0
    #allocation4 [shape = 'u8[65536]{0}', space=vmem, size = 0x10000, scoped, tag = 'input window, operand 1, single buffered']
    #allocation5 [shape = 's32[1]{0}', space=sflag, size = 0x4, scoped, tag = 'scoped memory for tpu_custom_call.1']
    #allocation6 [shape = 's32[1]{0}', space=sflag, size = 0x4, scoped, tag = 'scoped memory for tpu_custom_call.1']
    #allocation7 [shape = 'u8[16384]{0}', space=vmem, size = 0x4000, scoped, tag = 'output window, operand 0, single buffered']
    #allocation8 [shape = 'u8[1024]{0}', space=vmem, size = 0x400, scoped, tag = 'output window, operand 1, single buffered']
    #allocation9 [shape = 's32[1]{0}', space=sflag, size = 0x4, scoped, tag = 'scoped memory for tpu_custom_call.1']
    %16 = vsyncpa [#allocation5], 0
    %17 = vsyncpa [#allocation6], 0
    %18 = vsyncpa [#allocation9], 0
    // Predicated region
    $region2: #{tpu_custom_call.1} parent=1 // pred_check
      _
    $region3: #{tpu_custom_call.1} parent=1 // pred_check_branch
      %20 = sbr.rel (0) target = $region5
    $region4: #{tpu_custom_call.1} parent=1 // pred_region
      _
    $region5: #{tpu_custom_call.1} parent=1 // pred_fallthru
      _
    // Predicated region
    $region6: #{tpu_custom_call.1} parent=1 // pred_check
      _
    $region7: #{tpu_custom_call.1} parent=1 // pred_check_branch
      %22 = sbr.rel (0) target = $region9
    $region8: #{tpu_custom_call.1} parent=1 // pred_region
      %s24 = ssub.s32 2048, 2048
      %25 = vsyncadd [#allocation5], %s24
      %s26 = sshll.u32 [#allocation4], 4
      %s27 = int_to_ptr.vmem [resolvable:$true] %s26
      %32 = dma.hbm_to_vmem [thread:$0]  %s1, 2048, %s27, [#allocation5], 64, 64, 4
    $region9: #{tpu_custom_call.1} parent=1 // pred_fallthru
      _
    // Predicated region
    $region10: #{tpu_custom_call.1} parent=1 // pred_check
      _
    $region11: #{tpu_custom_call.1} parent=1 // pred_check_branch
      %34 = sbr.rel (0) target = $region13
    $region12: #{tpu_custom_call.1} parent=1 // pred_region
      _
    $region13: #{tpu_custom_call.1} parent=1 // pred_fallthru
      _
    // Predicated region
    $region14: #{tpu_custom_call.1} parent=1 // pred_check
      _
    $region15: #{tpu_custom_call.1} parent=1 // pred_check_branch
      %36 = sbr.rel (0) target = $region17
    $region16: #{tpu_custom_call.1} parent=1 // pred_region
      _
    $region17: #{tpu_custom_call.1} parent=1 // pred_fallthru
      _
    // Predicated region
    $region18: #{tpu_custom_call.1} parent=1 // pred_check
      _
    $region19: #{tpu_custom_call.1} parent=1 // pred_check_branch
      %38 = sbr.rel (0) target = $region21
    $region20: #{tpu_custom_call.1} parent=1 // pred_region
      _
    $region21: #{tpu_custom_call.1} parent=1 // pred_fallthru
      _
    // Predicated region
    $region22: #{tpu_custom_call.1} parent=1 // pred_check
      _
    $region23: #{tpu_custom_call.1} parent=1 // pred_check_branch
      %40 = sbr.rel (0) target = $region25
    $region24: #{tpu_custom_call.1} parent=1 // pred_region
      _
    $region25: #{tpu_custom_call.1} parent=1 // pred_fallthru
      _
    // Predicated region
    $region26: #{tpu_custom_call.1} parent=1 // pred_check
      _
    $region27: #{tpu_custom_call.1} parent=1 // pred_check_branch
      %42 = sbr.rel (0) target = $region29
    $region28: #{tpu_custom_call.1} parent=1 // pred_region
      _
    $region29: #{tpu_custom_call.1} parent=1 // pred_fallthru
      _
    // Predicated region
    $region30: #{tpu_custom_call.1} parent=1 // pred_check
      _
    $region31: #{tpu_custom_call.1} parent=1 // pred_check_branch
      %44 = sbr.rel (0) target = $region33
    $region32: #{tpu_custom_call.1} parent=1 // pred_region
      _
    $region33: #{tpu_custom_call.1} parent=1 // pred_fallthru
      _
    // Predicated region
    $region34: #{tpu_custom_call.1} parent=1 // pred_check
      _
    $region35: #{tpu_custom_call.1} parent=1 // pred_check_branch
      %46 = sbr.rel (0) target = $region37
    $region36: #{tpu_custom_call.1} parent=1 // pred_region
      _
    $region37: #{tpu_custom_call.1} parent=1 // pred_fallthru
      _
    // Predicated region
    $region38: #{tpu_custom_call.1} parent=1 // pred_check
      _
    $region39: #{tpu_custom_call.1} parent=1 // pred_check_branch
      %48 = sbr.rel (0) target = $region41
    $region40: #{tpu_custom_call.1} parent=1 // pred_region
      %49 = dma.done [#allocation5], 2048
    $region41: #{tpu_custom_call.1} parent=1 // pred_fallthru
      _
    %v51 = vld [vmem:[%s2] sm:$0xff]
    %v52 = vld [vmem:[%s2 + $0x8] sm:$0xff]
    %v53 = vld [vmem:[%s2 + $0x10] sm:$0xff]
    %v54 = vld [vmem:[%s2 + $0x18] sm:$0xff]
    %v55 = vld [vmem:[%s0] sm:$0xff]
    %v56 = vld [vmem:[%s0 + $0x8] sm:$0xff]
    %v57 = vld [vmem:[%s3] sm:$0xff]
    %v58 = vld [vmem:[%s3 + $0x8] sm:$0xff]
    %v59 = vld [vmem:[%s3 + $0x10] sm:$0xff]
    %v60 = vld [vmem:[%s3 + $0x18] sm:$0xff]
    %62 = vset.pattern.permute.xlu0 0
    %63 = vperm.xlu0 %62, %v57
    %v64 = vpop.permute.xlu0 %63
    %67 = vset.pattern.permute.xlu0 0
    %68 = vperm.xlu0 %67, %v58
    %v69 = vpop.permute.xlu0 %68
    %72 = vset.pattern.permute.xlu0 0
    %73 = vperm.xlu0 %72, %v59
    %v74 = vpop.permute.xlu0 %73
    %77 = vset.pattern.permute.xlu0 0
    %78 = vperm.xlu0 %77, %v60
    %v79 = vpop.permute.xlu0 %78
    %vm81 = vcmask 64512
    %v83 = vsel %vm81, %v51, 0
    %v86 = vsel %vm81, %v52, 0
    %v89 = vsel %vm81, %v53, 0
    %v92 = vsel %vm81, %v54, 0
    %94 = vmatprep.subr.mxu0 0.0
    %95 = vmatpush1.msra.mxu0 0.0
    %96 = vmatprep.subr.mxu0 0.0
    %97 = vmatpush1.msra.mxu0 0.0
    %98 = vmatprep.subr.mxu0 0.0
    %99 = vmatpush1.msra.mxu0 0.0
    %100 = vmatprep.subr.mxu0 0.0
    %101 = vmatpush1.msra.mxu0 0.0
    %102 = vmatprep.subr.mxu0 0.0
    %103 = vmatpush1.msra.mxu0 0.0
    %104 = vmatprep.subr.mxu0 0.0
    %105 = vmatpush1.msra.mxu0 0.0
    %106 = vmatprep.subr.mxu0 0.0
    %107 = vmatpush1.msra.mxu0 0.0
    %108 = vmatprep.subr.mxu0 0.0
    %109 = vmatpush1.msra.mxu0 0.0
    %110 = vmatprep.subr.mxu0 0.0
    %111 = vmatpush1.msra.mxu0 0.0
    %112 = vmatprep.subr.mxu0 0.0
    %113 = vmatpush1.msra.mxu0 0.0
    %114 = vmatprep.subr.mxu0 0.0
    %115 = vmatpush1.msra.mxu0 0.0
    %116 = vmatprep.subr.mxu0 0.0
    %117 = vmatpush1.msra.mxu0 0.0
    %118 = vmatprep.subr.mxu0 0.0
    %119 = vmatpush1.msra.mxu0 0.0
    %120 = vmatprep.subr.mxu0 0.0
    %121 = vmatpush1.msra.mxu0 0.0
    %122 = vmatprep.subr.mxu0 0.0
    %123 = vmatpush1.msra.mxu0 0.0
    %124 = vmatprep.subr.mxu0 %v56
    %125 = vmatpush1.msra.mxu0 %v55
    %126 = vmatprep.subr.mxu0 0.0
    %127 = vmatpush2.msra.mxu0 0.0
    %128 = vmatprep.subr.mxu0 0.0
    %129 = vmatpush2.msra.mxu0 0.0
    %130 = vmatprep.subr.mxu0 0.0
    %131 = vmatpush2.msra.mxu0 0.0
    %132 = vmatprep.subr.mxu0 0.0
    %133 = vmatpush2.msra.mxu0 0.0
    %134 = vmatprep.subr.mxu0 0.0
    %135 = vmatpush2.msra.mxu0 0.0
    %136 = vmatprep.subr.mxu0 0.0
    %137 = vmatpush2.msra.mxu0 0.0
    %138 = vmatprep.subr.mxu0 0.0
    %139 = vmatpush2.msra.mxu0 0.0
    %140 = vmatprep.subr.mxu0 0.0
    %141 = vmatpush2.msra.mxu0 0.0
    %142 = vmatprep.subr.mxu0 0.0
    %143 = vmatpush2.msra.mxu0 0.0
    %144 = vmatprep.subr.mxu0 0.0
    %145 = vmatpush2.msra.mxu0 0.0
    %146 = vmatprep.subr.mxu0 0.0
    %147 = vmatpush2.msra.mxu0 0.0
    %148 = vmatprep.subr.mxu0 0.0
    %149 = vmatpush2.msra.mxu0 0.0
    %150 = vmatprep.subr.mxu0 0.0
    %151 = vmatpush2.msra.mxu0 0.0
    %152 = vmatprep.subr.mxu0 0.0
    %153 = vmatpush2.msra.mxu0 0.0
    %154 = vmatprep.subr.mxu0 0.0
    %155 = vmatpush2.msra.mxu0 0.0
    %156 = vmatprep.subr.mxu0 0.0
    %157 = vmatpush2.msra.mxu0 0.0
    %158 = vmatprep.mubr.f32.mxu0 0.0
    %159 = vmatmul.mubr.f32.gmra.mxu0 %v83
    %v160 = vpop.f32.mrf.mxu0
    %v161 = vadd.f32 %v64, %v160
    %v162 = vpop.f32.mrf.mxu0
    %v163 = vadd.f32 %v64, %v162
    %164 = vmatprep.mubr.f32.mxu0 0.0
    %165 = vmatmul.mubr.f32.gmra.mxu0 %v86
    %v166 = vpop.f32.mrf.mxu0
    %v167 = vadd.f32 %v69, %v166
    %v168 = vpop.f32.mrf.mxu0
    %v169 = vadd.f32 %v69, %v168
    %170 = vmatprep.mubr.f32.mxu0 0.0
    %171 = vmatmul.mubr.f32.gmra.mxu0 %v89
    %v172 = vpop.f32.mrf.mxu0
    %v173 = vadd.f32 %v74, %v172
    %v174 = vpop.f32.mrf.mxu0
    %v175 = vadd.f32 %v74, %v174
    %176 = vmatprep.mubr.f32.mxu0 0.0
    %177 = vmatmul.mubr.f32.gmra.mxu0 %v92
    %v178 = vpop.f32.mrf.mxu0
    %v179 = vadd.f32 %v79, %v178
    %v180 = vpop.f32.mrf.mxu0
    %v181 = vadd.f32 %v79, %v180
    %182 = vdwg.mxu0
    %v183 = vpack.c.bf16 %v167, %v161
    %v184 = vpack.c.bf16 %v169, %v163
    %v185 = vpack.c.bf16 %v179, %v173
    %v186 = vpack.c.bf16 %v181, %v175
    %v191 = vunpack.c.l.b16 %v183
    %v192 = vunpack.c.l.b16 %v184
    %v193 = vunpack.c.h.b16 %v183
    %v194 = vunpack.c.h.b16 %v184
    %v195 = vunpack.c.l.b16 %v185
    %v196 = vunpack.c.l.b16 %v186
    %v197 = vunpack.c.h.b16 %v185
    %v198 = vunpack.c.h.b16 %v186
    %v199 = vpack.c.b16 %v192, %v191
    %v200 = vpack.c.b16 %v194, %v193
    %v201 = vpack.c.b16 %v196, %v195
    %v202 = vpack.c.b16 %v198, %v197
    %207 = vst [vmem:[#allocation2] sm:$0xff] %v199
    %208 = vst [vmem:[#allocation2 + $0x8] sm:$0xff] %v200
    %209 = vst [vmem:[#allocation2 + $0x10] sm:$0xff] %v201
    %210 = vst [vmem:[#allocation2 + $0x18] sm:$0xff] %v202
    %v211 = vld [vmem:[#allocation2] sm:$0xf]
    %v212 = vld [vmem:[#allocation2 + $0x8] sm:$0xf]
    %v213 = vld [vmem:[#allocation2 + $0x10] sm:$0xf]
    %v214 = vld [vmem:[#allocation2 + $0x18] sm:$0xf]
    %v215 = vld [vmem:[#allocation4] sm:$0xf]
    %v216 = vld [vmem:[#allocation4 + $0x4] sm:$0xf]
    %v217 = vld [vmem:[#allocation4 + $0x8] sm:$0xf]
    %v218 = vld [vmem:[#allocation4 + $0xc] sm:$0xf]
    %v219 = vld [vmem:[#allocation4 + $0x10] sm:$0xf]
    %v220 = vld [vmem:[#allocation4 + $0x14] sm:$0xf]
    %v221 = vld [vmem:[#allocation4 + $0x18] sm:$0xf]
    %v222 = vld [vmem:[#allocation4 + $0x1c] sm:$0xf]
    %v223 = vld [vmem:[#allocation4 + $0x20] sm:$0xf]
    %v224 = vld [vmem:[#allocation4 + $0x24] sm:$0xf]
    %v225 = vld [vmem:[#allocation4 + $0x28] sm:$0xf]
    %v226 = vld [vmem:[#allocation4 + $0x2c] sm:$0xf]
    %v227 = vld [vmem:[#allocation4 + $0x30] sm:$0xf]
    %v228 = vld [vmem:[#allocation4 + $0x34] sm:$0xf]
    %v229 = vld [vmem:[#allocation4 + $0x38] sm:$0xf]
    %v230 = vld [vmem:[#allocation4 + $0x3c] sm:$0xf]
    %v235 = vunpack.c.l.b16 %v211
    %v236 = vunpack.c.l.b16 %v212
    %v237 = vunpack.c.l.b16 %v213
    %v238 = vunpack.c.l.b16 %v214
    %v239 = vpack.c.b16 %v236, %v235
    %v240 = vpack.c.b16 %v238, %v237
    %v259 = vunpack.c.l.b16 %v215
    %v260 = vunpack.c.l.b16 %v216
    %v261 = vunpack.c.l.b16 %v217
    %v262 = vunpack.c.l.b16 %v218
    %v263 = vunpack.c.l.b16 %v219
    %v264 = vunpack.c.l.b16 %v220
    %v265 = vunpack.c.l.b16 %v221
    %v266 = vunpack.c.l.b16 %v222
    %v267 = vunpack.c.l.b16 %v223
    %v268 = vunpack.c.l.b16 %v224
    %v269 = vunpack.c.l.b16 %v225
    %v270 = vunpack.c.l.b16 %v226
    %v271 = vunpack.c.l.b16 %v227
    %v272 = vunpack.c.l.b16 %v228
    %v273 = vunpack.c.l.b16 %v229
    %v274 = vunpack.c.l.b16 %v230
    %v275 = vpack.c.b16 %v260, %v259
    %v276 = vpack.c.b16 %v262, %v261
    %v277 = vpack.c.b16 %v264, %v263
    %v278 = vpack.c.b16 %v266, %v265
    %v279 = vpack.c.b16 %v268, %v267
    %v280 = vpack.c.b16 %v270, %v269
    %v281 = vpack.c.b16 %v272, %v271
    %v282 = vpack.c.b16 %v274, %v273
    %291 = vmatprep.subr.bf16.mxu0 0
    %292 = vmatpush1.bf16.msra.mxu0 %v282
    %293 = vmatprep.subr.bf16.mxu0 0
    %294 = vmatpush1.bf16.msra.mxu0 %v281
    %295 = vmatprep.subr.bf16.mxu0 0
    %296 = vmatpush1.bf16.msra.mxu0 %v280
    %297 = vmatprep.subr.bf16.mxu0 0
    %298 = vmatpush1.bf16.msra.mxu0 %v279
    %299 = vmatprep.subr.bf16.mxu0 0
    %300 = vmatpush1.bf16.msra.mxu0 %v278
    %301 = vmatprep.subr.bf16.mxu0 0
    %302 = vmatpush1.bf16.msra.mxu0 %v277
    %303 = vmatprep.subr.bf16.mxu0 0
    %304 = vmatpush1.bf16.msra.mxu0 %v276
    %305 = vmatprep.subr.bf16.mxu0 0
    %306 = vmatpush1.bf16.msra.mxu0 %v275
    %307 = vmatprep.subr.bf16.mxu0 0
    %308 = vmatpush2.bf16.msra.mxu0 0
    %309 = vmatprep.subr.bf16.mxu0 0
    %310 = vmatpush2.bf16.msra.mxu0 0
    %311 = vmatprep.subr.bf16.mxu0 0
    %312 = vmatpush2.bf16.msra.mxu0 0
    %313 = vmatprep.subr.bf16.mxu0 0
    %314 = vmatpush2.bf16.msra.mxu0 0
    %315 = vmatprep.subr.bf16.mxu0 0
    %316 = vmatpush2.bf16.msra.mxu0 0
    %317 = vmatprep.subr.bf16.mxu0 0
    %318 = vmatpush2.bf16.msra.mxu0 0
    %319 = vmatprep.subr.bf16.mxu0 0
    %320 = vmatpush2.bf16.msra.mxu0 0
    %321 = vmatprep.subr.bf16.mxu0 0
    %322 = vmatpush2.bf16.msra.mxu0 0
    %323 = vmatprep.mubr.bf16.mxu0 0
    %324 = vmatmul.mubr.bf16.gmra.mxu0 %v239
    %v325 = vpop.f32.mrf.mxu0
    %v326 = vadd.f32 0.0, %v325
    %v327 = vpop.f32.mrf.mxu0
    %v328 = vpop.f32.mrf.mxu0
    %v329 = vadd.f32 0.0, %v328
    %v330 = vpop.f32.mrf.mxu0
    %331 = vmatprep.mubr.bf16.mxu0 0
    %332 = vmatmul.mubr.bf16.gmra.mxu0 %v240
    %v333 = vpop.f32.mrf.mxu0
    %v334 = vadd.f32 0.0, %v333
    %v335 = vpop.f32.mrf.mxu0
    %v336 = vpop.f32.mrf.mxu0
    %v337 = vadd.f32 0.0, %v336
    %v338 = vpop.f32.mrf.mxu0
    %339 = vdwg.mxu0
    %340 = vst [vmem:[#allocation3] sm:$0xff] %v326
    %341 = vst [vmem:[#allocation3 + $0x10] sm:$0xff] %v329
    %342 = vst [vmem:[#allocation3 + $0x20] sm:$0xff] %v334
    %343 = vst [vmem:[#allocation3 + $0x30] sm:$0xff] %v337
    %v344 = vld [vmem:[#allocation2 + $0x4] sm:$0xf]
    %v345 = vld [vmem:[#allocation2 + $0xc] sm:$0xf]
    %v346 = vld [vmem:[#allocation2 + $0x14] sm:$0xf]
    %v347 = vld [vmem:[#allocation2 + $0x1c] sm:$0xf]
    %s348 = scalar_lea.vmem [#allocation4], 64
    %v349 = vld [vmem:[%s348] sm:$0xf]
    %v350 = vld [vmem:[%s348 + $0x4] sm:$0xf]
    %v351 = vld [vmem:[%s348 + $0x8] sm:$0xf]
    %v352 = vld [vmem:[%s348 + $0xc] sm:$0xf]
    %v353 = vld [vmem:[%s348 + $0x10] sm:$0xf]
    %v354 = vld [vmem:[%s348 + $0x14] sm:$0xf]
    %v355 = vld [vmem:[%s348 + $0x18] sm:$0xf]
    %v356 = vld [vmem:[%s348 + $0x1c] sm:$0xf]
    %v357 = vld [vmem:[%s348 + $0x20] sm:$0xf]
    %v358 = vld [vmem:[%s348 + $0x24] sm:$0xf]
    %v359 = vld [vmem:[%s348 + $0x28] sm:$0xf]
    %v360 = vld [vmem:[%s348 + $0x2c] sm:$0xf]
    %v361 = vld [vmem:[%s348 + $0x30] sm:$0xf]
    %v362 = vld [vmem:[%s348 + $0x34] sm:$0xf]
    %v363 = vld [vmem:[%s348 + $0x38] sm:$0xf]
    %v364 = vld [vmem:[%s348 + $0x3c] sm:$0xf]
    %v369 = vunpack.c.l.b16 %v344
    %v370 = vunpack.c.l.b16 %v345
    %v371 = vunpack.c.l.b16 %v346
    %v372 = vunpack.c.l.b16 %v347
    %v373 = vpack.c.b16 %v370, %v369
    %v374 = vpack.c.b16 %v372, %v371
    %v393 = vunpack.c.l.b16 %v349
    %v394 = vunpack.c.l.b16 %v350
    %v395 = vunpack.c.l.b16 %v351
    %v396 = vunpack.c.l.b16 %v352
    %v397 = vunpack.c.l.b16 %v353
    %v398 = vunpack.c.l.b16 %v354
    %v399 = vunpack.c.l.b16 %v355
    %v400 = vunpack.c.l.b16 %v356
    %v401 = vunpack.c.l.b16 %v357
    %v402 = vunpack.c.l.b16 %v358
    %v403 = vunpack.c.l.b16 %v359
    %v404 = vunpack.c.l.b16 %v360
    %v405 = vunpack.c.l.b16 %v361
    %v406 = vunpack.c.l.b16 %v362
    %v407 = vunpack.c.l.b16 %v363
    %v408 = vunpack.c.l.b16 %v364
    %v409 = vpack.c.b16 %v394, %v393
    %v410 = vpack.c.b16 %v396, %v395
    %v411 = vpack.c.b16 %v398, %v397
    %v412 = vpack.c.b16 %v400, %v399
    %v413 = vpack.c.b16 %v402, %v401
    %v414 = vpack.c.b16 %v404, %v403
    %v415 = vpack.c.b16 %v406, %v405
    %v416 = vpack.c.b16 %v408, %v407
    %425 = vmatprep.subr.bf16.mxu0 0
    %426 = vmatpush1.bf16.msra.mxu0 %v416
    %427 = vmatprep.subr.bf16.mxu0 0
    %428 = vmatpush1.bf16.msra.mxu0 %v415
    %429 = vmatprep.subr.bf16.mxu0 0
    %430 = vmatpush1.bf16.msra.mxu0 %v414
    %431 = vmatprep.subr.bf16.mxu0 0
    %432 = vmatpush1.bf16.msra.mxu0 %v413
    %433 = vmatprep.subr.bf16.mxu0 0
    %434 = vmatpush1.bf16.msra.mxu0 %v412
    %435 = vmatprep.subr.bf16.mxu0 0
    %436 = vmatpush1.bf16.msra.mxu0 %v411
    %437 = vmatprep.subr.bf16.mxu0 0
    %438 = vmatpush1.bf16.msra.mxu0 %v410
    %439 = vmatprep.subr.bf16.mxu0 0
    %440 = vmatpush1.bf16.msra.mxu0 %v409
    %441 = vmatprep.subr.bf16.mxu0 0
    %442 = vmatpush2.bf16.msra.mxu0 0
    %443 = vmatprep.subr.bf16.mxu0 0
    %444 = vmatpush2.bf16.msra.mxu0 0
    %445 = vmatprep.subr.bf16.mxu0 0
    %446 = vmatpush2.bf16.msra.mxu0 0
    %447 = vmatprep.subr.bf16.mxu0 0
    %448 = vmatpush2.bf16.msra.mxu0 0
    %449 = vmatprep.subr.bf16.mxu0 0
    %450 = vmatpush2.bf16.msra.mxu0 0
    %451 = vmatprep.subr.bf16.mxu0 0
    %452 = vmatpush2.bf16.msra.mxu0 0
    %453 = vmatprep.subr.bf16.mxu0 0
    %454 = vmatpush2.bf16.msra.mxu0 0
    %455 = vmatprep.subr.bf16.mxu0 0
    %456 = vmatpush2.bf16.msra.mxu0 0
    %457 = vmatprep.mubr.bf16.mxu0 0
    %458 = vmatmul.mubr.bf16.gmra.mxu0 %v373
    %v459 = vpop.f32.mrf.mxu0
    %v460 = vadd.f32 0.0, %v459
    %v461 = vpop.f32.mrf.mxu0
    %v462 = vpop.f32.mrf.mxu0
    %v463 = vadd.f32 0.0, %v462
    %v464 = vpop.f32.mrf.mxu0
    %465 = vmatprep.mubr.bf16.mxu0 0
    %466 = vmatmul.mubr.bf16.gmra.mxu0 %v374
    %v467 = vpop.f32.mrf.mxu0
    %v468 = vadd.f32 0.0, %v467
    %v469 = vpop.f32.mrf.mxu0
    %v470 = vpop.f32.mrf.mxu0
    %v471 = vadd.f32 0.0, %v470
    %v472 = vpop.f32.mrf.mxu0
    %473 = vdwg.mxu0
    %474 = vst [vmem:[#allocation3 + $0x8] sm:$0xff] %v460
    %475 = vst [vmem:[#allocation3 + $0x18] sm:$0xff] %v463
    %476 = vst [vmem:[#allocation3 + $0x28] sm:$0xff] %v468
    %477 = vst [vmem:[#allocation3 + $0x38] sm:$0xff] %v471
    %v478 = vld [vmem:[%s4] sm:$0xff]
    %v479 = vld [vmem:[%s4 + $0x8] sm:$0xff]
    %v480 = vld [vmem:[%s4 + $0x10] sm:$0xff]
    %v481 = vld [vmem:[%s4 + $0x18] sm:$0xff]
    %v482 = vld [vmem:[#allocation3] sm:$0xff]
    %v483 = vld [vmem:[#allocation3 + $0x8] sm:$0xff]
    %v484 = vld [vmem:[#allocation3 + $0x10] sm:$0xff]
    %v485 = vld [vmem:[#allocation3 + $0x18] sm:$0xff]
    %v486 = vld [vmem:[#allocation3 + $0x20] sm:$0xff]
    %v487 = vld [vmem:[#allocation3 + $0x28] sm:$0xff]
    %v488 = vld [vmem:[#allocation3 + $0x30] sm:$0xff]
    %v489 = vld [vmem:[#allocation3 + $0x38] sm:$0xff]
    %v490 = vld [vmem:[%s5] sm:$0xff]
    %v491 = vld [vmem:[%s5 + $0x8] sm:$0xff]
    %v492 = vld [vmem:[%s5 + $0x10] sm:$0xff]
    %v493 = vld [vmem:[%s5 + $0x18] sm:$0xff]
    %495 = vset.pattern.permute.xlu0 0
    %496 = vperm.xlu0 %495, %v490
    %v497 = vpop.permute.xlu0 %496
    %500 = vset.pattern.permute.xlu0 0
    %501 = vperm.xlu0 %500, %v491
    %v502 = vpop.permute.xlu0 %501
    %505 = vset.pattern.permute.xlu0 0
    %506 = vperm.xlu0 %505, %v492
    %v507 = vpop.permute.xlu0 %506
    %510 = vset.pattern.permute.xlu0 0
    %511 = vperm.xlu0 %510, %v493
    %v512 = vpop.permute.xlu0 %511
    %vm514 = vcmask 261120
    %v516 = vsel %vm514, %v478, 0
    %v519 = vsel %vm514, %v479, 0
    %v522 = vsel %vm514, %v480, 0
    %v525 = vsel %vm514, %v481, 0
    %527 = vmatprep.subr.mxu0 0.0
    %528 = vmatpush1.msra.mxu0 0.0
    %529 = vmatprep.subr.mxu0 0.0
    %530 = vmatpush1.msra.mxu0 0.0
    %531 = vmatprep.subr.mxu0 0.0
    %532 = vmatpush1.msra.mxu0 0.0
    %533 = vmatprep.subr.mxu0 0.0
    %534 = vmatpush1.msra.mxu0 0.0
    %535 = vmatprep.subr.mxu0 0.0
    %536 = vmatpush1.msra.mxu0 0.0
    %537 = vmatprep.subr.mxu0 0.0
    %538 = vmatpush1.msra.mxu0 0.0
    %539 = vmatprep.subr.mxu0 0.0
    %540 = vmatpush1.msra.mxu0 0.0
    %541 = vmatprep.subr.mxu0 0.0
    %542 = vmatpush1.msra.mxu0 0.0
    %543 = vmatprep.subr.mxu0 0.0
    %544 = vmatpush1.msra.mxu0 0.0
    %545 = vmatprep.subr.mxu0 0.0
    %546 = vmatpush1.msra.mxu0 0.0
    %547 = vmatprep.subr.mxu0 0.0
    %548 = vmatpush1.msra.mxu0 0.0
    %549 = vmatprep.subr.mxu0 0.0
    %550 = vmatpush1.msra.mxu0 0.0
    %551 = vmatprep.subr.mxu0 %v489
    %552 = vmatpush1.msra.mxu0 %v488
    %553 = vmatprep.subr.mxu0 %v487
    %554 = vmatpush1.msra.mxu0 %v486
    %555 = vmatprep.subr.mxu0 %v485
    %556 = vmatpush1.msra.mxu0 %v484
    %557 = vmatprep.subr.mxu0 %v483
    %558 = vmatpush1.msra.mxu0 %v482
    %559 = vmatprep.subr.mxu0 0.0
    %560 = vmatpush2.msra.mxu0 0.0
    %561 = vmatprep.subr.mxu0 0.0
    %562 = vmatpush2.msra.mxu0 0.0
    %563 = vmatprep.subr.mxu0 0.0
    %564 = vmatpush2.msra.mxu0 0.0
    %565 = vmatprep.subr.mxu0 0.0
    %566 = vmatpush2.msra.mxu0 0.0
    %567 = vmatprep.subr.mxu0 0.0
    %568 = vmatpush2.msra.mxu0 0.0
    %569 = vmatprep.subr.mxu0 0.0
    %570 = vmatpush2.msra.mxu0 0.0
    %571 = vmatprep.subr.mxu0 0.0
    %572 = vmatpush2.msra.mxu0 0.0
    %573 = vmatprep.subr.mxu0 0.0
    %574 = vmatpush2.msra.mxu0 0.0
    %575 = vmatprep.subr.mxu0 0.0
    %576 = vmatpush2.msra.mxu0 0.0
    %577 = vmatprep.subr.mxu0 0.0
    %578 = vmatpush2.msra.mxu0 0.0
    %579 = vmatprep.subr.mxu0 0.0
    %580 = vmatpush2.msra.mxu0 0.0
    %581 = vmatprep.subr.mxu0 0.0
    %582 = vmatpush2.msra.mxu0 0.0
    %583 = vmatprep.subr.mxu0 0.0
    %584 = vmatpush2.msra.mxu0 0.0
    %585 = vmatprep.subr.mxu0 0.0
    %586 = vmatpush2.msra.mxu0 0.0
    %587 = vmatprep.subr.mxu0 0.0
    %588 = vmatpush2.msra.mxu0 0.0
    %589 = vmatprep.subr.mxu0 0.0
    %590 = vmatpush2.msra.mxu0 0.0
    %591 = vmatprep.mubr.f32.mxu0 0.0
    %592 = vmatmul.mubr.f32.gmra.mxu0 %v516
    %v593 = vpop.f32.mrf.mxu0
    %v594 = vadd.f32 %v497, %v593
    %v595 = vpop.f32.mrf.mxu0
    %v596 = vadd.f32 %v497, %v595
    %597 = vmatprep.mubr.f32.mxu0 0.0
    %598 = vmatmul.mubr.f32.gmra.mxu0 %v519
    %v599 = vpop.f32.mrf.mxu0
    %v600 = vadd.f32 %v502, %v599
    %v601 = vpop.f32.mrf.mxu0
    %v602 = vadd.f32 %v502, %v601
    %603 = vmatprep.mubr.f32.mxu0 0.0
    %604 = vmatmul.mubr.f32.gmra.mxu0 %v522
    %v605 = vpop.f32.mrf.mxu0
    %v606 = vadd.f32 %v507, %v605
    %v607 = vpop.f32.mrf.mxu0
    %v608 = vadd.f32 %v507, %v607
    %609 = vmatprep.mubr.f32.mxu0 0.0
    %610 = vmatmul.mubr.f32.gmra.mxu0 %v525
    %v611 = vpop.f32.mrf.mxu0
    %v612 = vadd.f32 %v512, %v611
    %v613 = vpop.f32.mrf.mxu0
    %v614 = vadd.f32 %v512, %v613
    %615 = vdwg.mxu0
    %vm616 = vcmp.gt.f32.partialorder %v594, 0.0
    %vm617 = vcmp.gt.f32.partialorder %v596, 0.0
    %vm618 = vcmp.gt.f32.partialorder %v600, 0.0
    %vm619 = vcmp.gt.f32.partialorder %v602, 0.0
    %vm620 = vcmp.gt.f32.partialorder %v606, 0.0
    %vm621 = vcmp.gt.f32.partialorder %v608, 0.0
    %vm622 = vcmp.gt.f32.partialorder %v612, 0.0
    %vm623 = vcmp.gt.f32.partialorder %v614, 0.0
    %v624 = vmul.f32 %v594, 0.01
    %v625 = vmul.f32 %v596, 0.01
    %v626 = vmul.f32 %v600, 0.01
    %v627 = vmul.f32 %v602, 0.01
    %v628 = vmul.f32 %v606, 0.01
    %v629 = vmul.f32 %v608, 0.01
    %v630 = vmul.f32 %v612, 0.01
    %v631 = vmul.f32 %v614, 0.01
    %v632 = vsel %vm616, %v594, %v624
    %v633 = vsel %vm617, %v596, %v625
    %v634 = vsel %vm618, %v600, %v626
    %v635 = vsel %vm619, %v602, %v627
    %v636 = vsel %vm620, %v606, %v628
    %v637 = vsel %vm621, %v608, %v629
    %v638 = vsel %vm622, %v612, %v630
    %v639 = vsel %vm623, %v614, %v631
    %v640 = vld [vmem:[%s8] sm:$0x3]
    %v642 = vlaneseq
    %v643 = vshrl.u32 %v642, 7
    %v644 = vsub.s32 0, %v643
    %v645 = vrot.slane %v640, %v644
    %v646 = vlaneseq
    %v647 = vshrl.u32 %v646, 7
    %v648 = vsub.s32 1, %v647
    %v649 = vrot.slane %v640, %v648
    %v652 = vmul.f32 %v632, %v645
    %v653 = vmul.f32 %v633, %v649
    %v654 = vmul.f32 %v634, %v645
    %v655 = vmul.f32 %v635, %v649
    %v656 = vmul.f32 %v636, %v645
    %v657 = vmul.f32 %v637, %v649
    %v658 = vmul.f32 %v638, %v645
    %v659 = vmul.f32 %v639, %v649
    %v660 = vadd.f32 %v652, %v654
    %v661 = vadd.f32 %v660, %v656
    %v662 = vadd.f32 %v661, %v658
    %v663 = vrot.slane %v662, 4
    %v664 = vadd.f32 %v662, %v663
    %v665 = vrot.slane %v664, 2
    %v666 = vadd.f32 %v664, %v665
    %v667 = vrot.slane %v666, 1
    %v668 = vadd.f32 %v666, %v667
    %v669 = vadd.f32 %v653, %v655
    %v670 = vadd.f32 %v669, %v657
    %v671 = vadd.f32 %v670, %v659
    %v672 = vrot.slane %v671, 4
    %v673 = vadd.f32 %v671, %v672
    %v674 = vrot.slane %v673, 2
    %v675 = vadd.f32 %v673, %v674
    %v676 = vrot.slane %v675, 1
    %v677 = vadd.f32 %v675, %v676
    %v678 = vrcp.pop 32.0
    %v679 = vmul.f32 %v668, %v678
    %v680 = vmul.f32 %v677, %v678
    %v681 = vld [vmem:[%s6] sm:$0x3]
    %v683 = vlaneseq
    %v684 = vshrl.u32 %v683, 7
    %v685 = vsub.s32 0, %v684
    %v686 = vrot.slane %v681, %v685
    %v687 = vlaneseq
    %v688 = vshrl.u32 %v687, 7
    %v689 = vsub.s32 1, %v688
    %v690 = vrot.slane %v681, %v689
    %v693 = vmul.f32 %v679, %v686
    %v694 = vmul.f32 %v680, %v690
    %v695 = vld [vmem:[%s7] sm:$0x3]
    %v697 = vlaneseq
    %v698 = vshrl.u32 %v697, 7
    %v699 = vsub.s32 0, %v698
    %v700 = vrot.slane %v695, %v699
    %v701 = vlaneseq
    %v702 = vshrl.u32 %v701, 7
    %v703 = vsub.s32 1, %v702
    %v704 = vrot.slane %v695, %v703
    %v707 = vadd.f32 %v693, %v700
    %v708 = vadd.f32 %v694, %v704
    %v709 = vpack.c.bf16 %v654, %v652
    %v710 = vpack.c.bf16 %v655, %v653
    %v711 = vpack.c.bf16 %v658, %v656
    %v712 = vpack.c.bf16 %v659, %v657
    %v715 = vunpack.c.l.b16 %v709
    %v716 = vunpack.c.h.b16 %v709
    %v717 = vunpack.c.l.b16 %v711
    %v718 = vunpack.c.h.b16 %v711
    %v719 = vpack.c.b16 %v715, %v715
    %v720 = vpack.c.b16 %v716, %v716
    %v721 = vpack.c.b16 %v717, %v717
    %v722 = vpack.c.b16 %v718, %v718
    %727 = vst [vmem:[#allocation7] sm:$0xf] %v719
    %728 = vst [vmem:[#allocation7 + $0x4] sm:$0xf] %v720
    %729 = vst [vmem:[#allocation7 + $0x8] sm:$0xf] %v721
    %730 = vst [vmem:[#allocation7 + $0xc] sm:$0xf] %v722
    %731 = vst [vmem:[#allocation8] sm:$0x1] %v707
    %v734 = vunpack.c.l.b16 %v710
    %v735 = vunpack.c.h.b16 %v710
    %v736 = vunpack.c.l.b16 %v712
    %v737 = vunpack.c.h.b16 %v712
    %v738 = vpack.c.b16 %v734, %v734
    %v739 = vpack.c.b16 %v735, %v735
    %v740 = vpack.c.b16 %v736, %v736
    %v741 = vpack.c.b16 %v737, %v737
    %s746 = scalar_lea.vmem [#allocation7], 16
    %747 = vst [vmem:[%s746] sm:$0xf] %v738
    %748 = vst [vmem:[%s746 + $0x4] sm:$0xf] %v739
    %749 = vst [vmem:[%s746 + $0x8] sm:$0xf] %v740
    %750 = vst [vmem:[%s746 + $0xc] sm:$0xf] %v741
    %s751 = scalar_lea.vmem [#allocation8], 1
    %752 = vst [vmem:[%s751] sm:$0x1] %v708
    // Predicated region
    $region42: #{tpu_custom_call.1} parent=1 // pred_check
      _
    $region43: #{tpu_custom_call.1} parent=1 // pred_check_branch
      %754 = sbr.rel (0) target = $region45
    $region44: #{tpu_custom_call.1} parent=1 // pred_region
      %s756 = ssub.s32 512, 512
      %757 = vsyncadd [#allocation6], %s756
      %s758 = sshll.u32 [#allocation7], 4
      %s759 = int_to_ptr.vmem [resolvable:$true] %s758
      %764 = dma.vmem_to_hbm [thread:$0]  %s759, 512, %s9, [#allocation6], 64, 64, 4
    $region45: #{tpu_custom_call.1} parent=1 // pred_fallthru
      _
    // Predicated region
    $region46: #{tpu_custom_call.1} parent=1 // pred_check
      _
    $region47: #{tpu_custom_call.1} parent=1 // pred_check_branch
      %766 = sbr.rel (0) target = $region49
    $region48: #{tpu_custom_call.1} parent=1 // pred_region
      %s768 = ssub.s32 32, 32
      %769 = vsyncadd [#allocation9], %s768
      %s770 = sshll.u32 [#allocation8], 4
      %s771 = int_to_ptr.vmem [resolvable:$true] %s770
      %776 = dma.vmem_to_hbm [thread:$0]  %s771, 32, %s10, [#allocation9], 16, 16, 1
    $region49: #{tpu_custom_call.1} parent=1 // pred_fallthru
      _
    // Predicated region
    $region50: #{tpu_custom_call.1} parent=1 // pred_check
      _
    $region51: #{tpu_custom_call.1} parent=1 // pred_check_branch
      %778 = sbr.rel (0) target = $region53
    $region52: #{tpu_custom_call.1} parent=1 // pred_region
      %779 = dma.done [#allocation6], 512
    $region53: #{tpu_custom_call.1} parent=1 // pred_fallthru
      _
    // Predicated region
    $region54: #{tpu_custom_call.1} parent=1 // pred_check
      _
    $region55: #{tpu_custom_call.1} parent=1 // pred_check_branch
      %781 = sbr.rel (0) target = $region57
    $region56: #{tpu_custom_call.1} parent=1 // pred_region
      %782 = dma.done [#allocation9], 32
    $region57: #{tpu_custom_call.1} parent=1 // pred_fallthru
      _
    %783 = vsyncpa [#allocation5], 1
    %784 = vsyncpa [#allocation6], 1
    %785 = vsyncpa [#allocation9], 1

</llo_original>
